<compile_context>
chip_gen: v7x
topology: tpu7x:2x2x1
jax: 0.10.0
libtpu: 0.0.40
codegen_flags: <defaults>
</compile_context>

<pallas_src>
import jax
import jax.numpy as jnp
from jax.experimental import pallas as pl
from jax.experimental.pallas import tpu as pltpu

TILE_B_MAX = 131072  # max lane-dense batch tile; multiple of 1024 (sublane dim % 8 == 0)

# Flat SMEM parameter layout (35 f32 scalars), PyTorch [out, in] row-major:
#   [ 0:12) fc1 weight (4,3)
#   [12:16) fc1 bias   (4,)
#   [16:28) fc2 weight (3,4)
#   [28:31) fc2 bias   (3,)
#   [31:34) fc3 weight (1,3)
#   [34]    fc3 bias   (1,)
_W1, _B1, _W2, _B2, _W3, _B3 = 0, 12, 16, 28, 31, 34


def iris_mlp_kernel(p_ref, x_ref, o_ref):
    # p_ref: (35,) f32 in SMEM (scalar-prefetched).
    # x_ref: (3, S, 128) f32 in VMEM. o_ref: (S, 128) f32 in VMEM.
    rows = [x_ref[k] for k in range(3)]  # each a dense (S, 128) slab

    def layer(inputs, w_off, b_off, n_out, n_in):
        outs = []
        for j in range(n_out):
            # Fold bias into the first FMA term; ReLU at the end.
            acc = inputs[0] * p_ref[w_off + j * n_in] + p_ref[b_off + j]
            for k in range(1, n_in):
                acc = acc + inputs[k] * p_ref[w_off + j * n_in + k]
            outs.append(jnp.maximum(acc, 0.0))
        return outs

    h1 = layer(rows, _W1, _B1, 4, 3)   # 4 x (S, 128)
    h2 = layer(h1,   _W2, _B2, 3, 4)   # 3 x (S, 128)
    h3 = layer(h2,   _W3, _B3, 1, 3)   # 1 x (S, 128)
    o_ref[...] = h3[0].astype(o_ref.dtype)


def _round_up(n, m):
    return ((n + m - 1) // m) * m


def _pack_params(params):
    return jnp.concatenate([
        params["fc1_w"].ravel(), params["fc1_b"],
        params["fc2_w"].ravel(), params["fc2_b"],
        params["fc3_w"].ravel(), params["fc3_b"],
    ]).astype(jnp.float32)  # (35,)


def iris_forward_packed(x3, p_flat, tile_b):
    """Core call. x3: (3, S_total, 128) f32, S_total*128 % tile_b == 0."""
    s_total = x3.shape[1]
    b_pad = s_total * 128
    n_tiles = b_pad // tile_b
    s_tile = tile_b // 128  # multiple of 8

    return pl.pallas_call(
        iris_mlp_kernel,
        out_shape=jax.ShapeDtypeStruct((s_total, 128), jnp.float32),
        grid_spec=pltpu.PrefetchScalarGridSpec(
            num_scalar_prefetch=1,                      # params -> SMEM, once
            grid=(n_tiles,),
            in_specs=[
                pl.BlockSpec((3, s_tile, 128), lambda i, p: (0, i, 0)),
            ],
            out_specs=pl.BlockSpec((s_tile, 128), lambda i, p: (i, 0)),
        ),
        compiler_params=pltpu.CompilerParams(
            # Batch tiles are independent -> megacore split on v7x.
            dimension_semantics=("parallel",)),
    )(p_flat, x3)


def iris_net_forward(x, params, *, max_tile_b=TILE_B_MAX):
    """x: [B, 3] float32 -> [B, 1] float32. params: PyTorch-layout weights.

    The transpose/pad below is layout plumbing only; feed feature-major
    (3, S, 128) data to iris_forward_packed directly to avoid it upstream.
    """
    B = x.shape[0]
    tile_b = min(max_tile_b, _round_up(B, 1024))   # multiple of 1024
    b_pad = _round_up(B, tile_b)

    x_fm = jnp.pad(x.astype(jnp.float32).T, ((0, 0), (0, b_pad - B)))  # (3, b_pad)
    x3 = x_fm.reshape(3, b_pad // 128, 128)

    out = iris_forward_packed(x3, _pack_params(params), tile_b)       # (b_pad//128, 128)
    return out.reshape(b_pad)[:B].reshape(B, 1)


def init_params(key):
    """Deterministic init matching nn.Linear shapes (uniform +-1/sqrt(fan_in))."""
    ks = jax.random.split(key, 6)

    def uniform(k, shape, fan_in):
        bound = 1.0 / jnp.sqrt(jnp.float32(fan_in))
        return jax.random.uniform(k, shape, jnp.float32, -bound, bound)

    return {
        "fc1_w": uniform(ks[0], (4, 3), 3),
        "fc1_b": uniform(ks[1], (4,), 3),
        "fc2_w": uniform(ks[2], (3, 4), 4),
        "fc2_b": uniform(ks[3], (3,), 4),
        "fc3_w": uniform(ks[4], (1, 3), 3),
        "fc3_b": uniform(ks[5], (1,), 3),
    }


def reference_forward(x, p):
    h = jnp.maximum(x @ p["fc1_w"].T + p["fc1_b"], 0.0)
    h = jnp.maximum(h @ p["fc2_w"].T + p["fc2_b"], 0.0)
    h = jnp.maximum(h @ p["fc3_w"].T + p["fc3_b"], 0.0)
    return h


if __name__ == "__main__":
    key = jax.random.PRNGKey(0)
    k_x, k_p = jax.random.split(key)
    batch = 200  # small; non-multiple of 128/1024 to exercise the padding path
    x = jax.random.normal(k_x, (batch, 3), dtype=jnp.float32)
    params = init_params(k_p)

    out = iris_net_forward(x, params)
    out = jax.block_until_ready(out)

    ref = reference_forward(x, params)
    assert out.shape == (batch, 1), out.shape
    assert jnp.allclose(out, ref, atol=1e-5, rtol=1e-5), "mismatch vs pure-JAX reference"
    print("KERNEL_OK")
</pallas_src>

<mosaic_0001>
module attributes {stable_mosaic.version = 11 : i64} {
  func.func @iris_mlp_kernel(%arg0: i32, %arg1: memref<35xf32, #tpu.memory_space<smem>>, %arg2: memref<3x8x128xf32, #tpu.memory_space<vmem>>, %arg3: memref<8x128xf32, #tpu.memory_space<vmem>>) attributes {dimension_semantics = [#tpu.dimension_semantics<parallel>], iteration_bounds = array<i64: 1>, scalar_prefetch = 1 : i64, scratch_operands = 0 : i64, tpu.core_type = #tpu.core_type<tc>, window_params = [{transform_indices = @transform_0, window_bounds = array<i64: 3, 8, 128>}, {transform_indices = @transform_1, window_bounds = array<i64: 8, 128>}]} {
    %c0 = arith.constant 0 : index
    %c0_0 = arith.constant 0 : index
    %c0_1 = arith.constant 0 : index
    %0 = vector.load %arg2[%c0, %c0_0, %c0_1] : memref<3x8x128xf32, #tpu.memory_space<vmem>>, vector<1x8x128xf32>
    %1 = vector.shape_cast %0 : vector<1x8x128xf32> to vector<8x128xf32>
    %c1 = arith.constant 1 : index
    %c0_2 = arith.constant 0 : index
    %c0_3 = arith.constant 0 : index
    %2 = vector.load %arg2[%c1, %c0_2, %c0_3] : memref<3x8x128xf32, #tpu.memory_space<vmem>>, vector<1x8x128xf32>
    %3 = vector.shape_cast %2 : vector<1x8x128xf32> to vector<8x128xf32>
    %c2 = arith.constant 2 : index
    %c0_4 = arith.constant 0 : index
    %c0_5 = arith.constant 0 : index
    %4 = vector.load %arg2[%c2, %c0_4, %c0_5] : memref<3x8x128xf32, #tpu.memory_space<vmem>>, vector<1x8x128xf32>
    %5 = vector.shape_cast %4 : vector<1x8x128xf32> to vector<8x128xf32>
    %c0_6 = arith.constant 0 : index
    %6 = memref.load %arg1[%c0_6] : memref<35xf32, #tpu.memory_space<smem>>
    %7 = vector.broadcast %6 : f32 to vector<8x128xf32>
    %8 = arith.mulf %1, %7 : vector<8x128xf32>
    %c12 = arith.constant 12 : index
    %9 = memref.load %arg1[%c12] : memref<35xf32, #tpu.memory_space<smem>>
    %10 = vector.broadcast %9 : f32 to vector<8x128xf32>
    %11 = arith.addf %8, %10 : vector<8x128xf32>
    %c1_7 = arith.constant 1 : index
    %12 = memref.load %arg1[%c1_7] : memref<35xf32, #tpu.memory_space<smem>>
    %13 = vector.broadcast %12 : f32 to vector<8x128xf32>
    %14 = arith.mulf %3, %13 : vector<8x128xf32>
    %15 = arith.addf %11, %14 : vector<8x128xf32>
    %c2_8 = arith.constant 2 : index
    %16 = memref.load %arg1[%c2_8] : memref<35xf32, #tpu.memory_space<smem>>
    %17 = vector.broadcast %16 : f32 to vector<8x128xf32>
    %18 = arith.mulf %5, %17 : vector<8x128xf32>
    %19 = arith.addf %15, %18 : vector<8x128xf32>
    %cst = arith.constant 0.000000e+00 : f32
    %20 = vector.broadcast %cst : f32 to vector<8x128xf32>
    %21 = arith.maximumf %19, %20 : vector<8x128xf32>
    %c3 = arith.constant 3 : index
    %22 = memref.load %arg1[%c3] : memref<35xf32, #tpu.memory_space<smem>>
    %23 = vector.broadcast %22 : f32 to vector<8x128xf32>
    %24 = arith.mulf %1, %23 : vector<8x128xf32>
    %c13 = arith.constant 13 : index
    %25 = memref.load %arg1[%c13] : memref<35xf32, #tpu.memory_space<smem>>
    %26 = vector.broadcast %25 : f32 to vector<8x128xf32>
    %27 = arith.addf %24, %26 : vector<8x128xf32>
    %c4 = arith.constant 4 : index
    %28 = memref.load %arg1[%c4] : memref<35xf32, #tpu.memory_space<smem>>
    %29 = vector.broadcast %28 : f32 to vector<8x128xf32>
    %30 = arith.mulf %3, %29 : vector<8x128xf32>
    %31 = arith.addf %27, %30 : vector<8x128xf32>
    %c5 = arith.constant 5 : index
    %32 = memref.load %arg1[%c5] : memref<35xf32, #tpu.memory_space<smem>>
    %33 = vector.broadcast %32 : f32 to vector<8x128xf32>
    %34 = arith.mulf %5, %33 : vector<8x128xf32>
    %35 = arith.addf %31, %34 : vector<8x128xf32>
    %cst_9 = arith.constant 0.000000e+00 : f32
    %36 = vector.broadcast %cst_9 : f32 to vector<8x128xf32>
    %37 = arith.maximumf %35, %36 : vector<8x128xf32>
    %c6 = arith.constant 6 : index
    %38 = memref.load %arg1[%c6] : memref<35xf32, #tpu.memory_space<smem>>
    %39 = vector.broadcast %38 : f32 to vector<8x128xf32>
    %40 = arith.mulf %1, %39 : vector<8x128xf32>
    %c14 = arith.constant 14 : index
    %41 = memref.load %arg1[%c14] : memref<35xf32, #tpu.memory_space<smem>>
    %42 = vector.broadcast %41 : f32 to vector<8x128xf32>
    %43 = arith.addf %40, %42 : vector<8x128xf32>
    %c7 = arith.constant 7 : index
    %44 = memref.load %arg1[%c7] : memref<35xf32, #tpu.memory_space<smem>>
    %45 = vector.broadcast %44 : f32 to vector<8x128xf32>
    %46 = arith.mulf %3, %45 : vector<8x128xf32>
    %47 = arith.addf %43, %46 : vector<8x128xf32>
    %c8 = arith.constant 8 : index
    %48 = memref.load %arg1[%c8] : memref<35xf32, #tpu.memory_space<smem>>
    %49 = vector.broadcast %48 : f32 to vector<8x128xf32>
    %50 = arith.mulf %5, %49 : vector<8x128xf32>
    %51 = arith.addf %47, %50 : vector<8x128xf32>
    %cst_10 = arith.constant 0.000000e+00 : f32
    %52 = vector.broadcast %cst_10 : f32 to vector<8x128xf32>
    %53 = arith.maximumf %51, %52 : vector<8x128xf32>
    %c9 = arith.constant 9 : index
    %54 = memref.load %arg1[%c9] : memref<35xf32, #tpu.memory_space<smem>>
    %55 = vector.broadcast %54 : f32 to vector<8x128xf32>
    %56 = arith.mulf %1, %55 : vector<8x128xf32>
    %c15 = arith.constant 15 : index
    %57 = memref.load %arg1[%c15] : memref<35xf32, #tpu.memory_space<smem>>
    %58 = vector.broadcast %57 : f32 to vector<8x128xf32>
    %59 = arith.addf %56, %58 : vector<8x128xf32>
    %c10 = arith.constant 10 : index
    %60 = memref.load %arg1[%c10] : memref<35xf32, #tpu.memory_space<smem>>
    %61 = vector.broadcast %60 : f32 to vector<8x128xf32>
    %62 = arith.mulf %3, %61 : vector<8x128xf32>
    %63 = arith.addf %59, %62 : vector<8x128xf32>
    %c11 = arith.constant 11 : index
    %64 = memref.load %arg1[%c11] : memref<35xf32, #tpu.memory_space<smem>>
    %65 = vector.broadcast %64 : f32 to vector<8x128xf32>
    %66 = arith.mulf %5, %65 : vector<8x128xf32>
    %67 = arith.addf %63, %66 : vector<8x128xf32>
    %cst_11 = arith.constant 0.000000e+00 : f32
    %68 = vector.broadcast %cst_11 : f32 to vector<8x128xf32>
    %69 = arith.maximumf %67, %68 : vector<8x128xf32>
    %c16 = arith.constant 16 : index
    %70 = memref.load %arg1[%c16] : memref<35xf32, #tpu.memory_space<smem>>
    %71 = vector.broadcast %70 : f32 to vector<8x128xf32>
    %72 = arith.mulf %21, %71 : vector<8x128xf32>
    %c28 = arith.constant 28 : index
    %73 = memref.load %arg1[%c28] : memref<35xf32, #tpu.memory_space<smem>>
    %74 = vector.broadcast %73 : f32 to vector<8x128xf32>
    %75 = arith.addf %72, %74 : vector<8x128xf32>
    %c17 = arith.constant 17 : index
    %76 = memref.load %arg1[%c17] : memref<35xf32, #tpu.memory_space<smem>>
    %77 = vector.broadcast %76 : f32 to vector<8x128xf32>
    %78 = arith.mulf %37, %77 : vector<8x128xf32>
    %79 = arith.addf %75, %78 : vector<8x128xf32>
    %c18 = arith.constant 18 : index
    %80 = memref.load %arg1[%c18] : memref<35xf32, #tpu.memory_space<smem>>
    %81 = vector.broadcast %80 : f32 to vector<8x128xf32>
    %82 = arith.mulf %53, %81 : vector<8x128xf32>
    %83 = arith.addf %79, %82 : vector<8x128xf32>
    %c19 = arith.constant 19 : index
    %84 = memref.load %arg1[%c19] : memref<35xf32, #tpu.memory_space<smem>>
    %85 = vector.broadcast %84 : f32 to vector<8x128xf32>
    %86 = arith.mulf %69, %85 : vector<8x128xf32>
    %87 = arith.addf %83, %86 : vector<8x128xf32>
    %cst_12 = arith.constant 0.000000e+00 : f32
    %88 = vector.broadcast %cst_12 : f32 to vector<8x128xf32>
    %89 = arith.maximumf %87, %88 : vector<8x128xf32>
    %c20 = arith.constant 20 : index
    %90 = memref.load %arg1[%c20] : memref<35xf32, #tpu.memory_space<smem>>
    %91 = vector.broadcast %90 : f32 to vector<8x128xf32>
    %92 = arith.mulf %21, %91 : vector<8x128xf32>
    %c29 = arith.constant 29 : index
    %93 = memref.load %arg1[%c29] : memref<35xf32, #tpu.memory_space<smem>>
    %94 = vector.broadcast %93 : f32 to vector<8x128xf32>
    %95 = arith.addf %92, %94 : vector<8x128xf32>
    %c21 = arith.constant 21 : index
    %96 = memref.load %arg1[%c21] : memref<35xf32, #tpu.memory_space<smem>>
    %97 = vector.broadcast %96 : f32 to vector<8x128xf32>
    %98 = arith.mulf %37, %97 : vector<8x128xf32>
    %99 = arith.addf %95, %98 : vector<8x128xf32>
    %c22 = arith.constant 22 : index
    %100 = memref.load %arg1[%c22] : memref<35xf32, #tpu.memory_space<smem>>
    %101 = vector.broadcast %100 : f32 to vector<8x128xf32>
    %102 = arith.mulf %53, %101 : vector<8x128xf32>
    %103 = arith.addf %99, %102 : vector<8x128xf32>
    %c23 = arith.constant 23 : index
    %104 = memref.load %arg1[%c23] : memref<35xf32, #tpu.memory_space<smem>>
    %105 = vector.broadcast %104 : f32 to vector<8x128xf32>
    %106 = arith.mulf %69, %105 : vector<8x128xf32>
    %107 = arith.addf %103, %106 : vector<8x128xf32>
    %cst_13 = arith.constant 0.000000e+00 : f32
    %108 = vector.broadcast %cst_13 : f32 to vector<8x128xf32>
    %109 = arith.maximumf %107, %108 : vector<8x128xf32>
    %c24 = arith.constant 24 : index
    %110 = memref.load %arg1[%c24] : memref<35xf32, #tpu.memory_space<smem>>
    %111 = vector.broadcast %110 : f32 to vector<8x128xf32>
    %112 = arith.mulf %21, %111 : vector<8x128xf32>
    %c30 = arith.constant 30 : index
    %113 = memref.load %arg1[%c30] : memref<35xf32, #tpu.memory_space<smem>>
    %114 = vector.broadcast %113 : f32 to vector<8x128xf32>
    %115 = arith.addf %112, %114 : vector<8x128xf32>
    %c25 = arith.constant 25 : index
    %116 = memref.load %arg1[%c25] : memref<35xf32, #tpu.memory_space<smem>>
    %117 = vector.broadcast %116 : f32 to vector<8x128xf32>
    %118 = arith.mulf %37, %117 : vector<8x128xf32>
    %119 = arith.addf %115, %118 : vector<8x128xf32>
    %c26 = arith.constant 26 : index
    %120 = memref.load %arg1[%c26] : memref<35xf32, #tpu.memory_space<smem>>
    %121 = vector.broadcast %120 : f32 to vector<8x128xf32>
    %122 = arith.mulf %53, %121 : vector<8x128xf32>
    %123 = arith.addf %119, %122 : vector<8x128xf32>
    %c27 = arith.constant 27 : index
    %124 = memref.load %arg1[%c27] : memref<35xf32, #tpu.memory_space<smem>>
    %125 = vector.broadcast %124 : f32 to vector<8x128xf32>
    %126 = arith.mulf %69, %125 : vector<8x128xf32>
    %127 = arith.addf %123, %126 : vector<8x128xf32>
    %cst_14 = arith.constant 0.000000e+00 : f32
    %128 = vector.broadcast %cst_14 : f32 to vector<8x128xf32>
    %129 = arith.maximumf %127, %128 : vector<8x128xf32>
    %c31 = arith.constant 31 : index
    %130 = memref.load %arg1[%c31] : memref<35xf32, #tpu.memory_space<smem>>
    %131 = vector.broadcast %130 : f32 to vector<8x128xf32>
    %132 = arith.mulf %89, %131 : vector<8x128xf32>
    %c34 = arith.constant 34 : index
    %133 = memref.load %arg1[%c34] : memref<35xf32, #tpu.memory_space<smem>>
    %134 = vector.broadcast %133 : f32 to vector<8x128xf32>
    %135 = arith.addf %132, %134 : vector<8x128xf32>
    %c32 = arith.constant 32 : index
    %136 = memref.load %arg1[%c32] : memref<35xf32, #tpu.memory_space<smem>>
    %137 = vector.broadcast %136 : f32 to vector<8x128xf32>
    %138 = arith.mulf %109, %137 : vector<8x128xf32>
    %139 = arith.addf %135, %138 : vector<8x128xf32>
    %c33 = arith.constant 33 : index
    %140 = memref.load %arg1[%c33] : memref<35xf32, #tpu.memory_space<smem>>
    %141 = vector.broadcast %140 : f32 to vector<8x128xf32>
    %142 = arith.mulf %129, %141 : vector<8x128xf32>
    %143 = arith.addf %139, %142 : vector<8x128xf32>
    %cst_15 = arith.constant 0.000000e+00 : f32
    %144 = vector.broadcast %cst_15 : f32 to vector<8x128xf32>
    %145 = arith.maximumf %143, %144 : vector<8x128xf32>
    %c0_16 = arith.constant 0 : index
    %c0_17 = arith.constant 0 : index
    %146 = vector.load %arg3[%c0_16, %c0_17] : memref<8x128xf32, #tpu.memory_space<vmem>>, vector<8x128xf32>
    tpu.vector_store %arg3[%c0_16, %c0_17], %145 {strides = array<i32>} : memref<8x128xf32, #tpu.memory_space<vmem>>, vector<8x128xf32>,
    return
  }
  func.func @transform_0(%arg0: i32, %arg1: memref<35xf32, #tpu.memory_space<smem>>) -> (i32, i32, i32) {
    %c0_i32 = arith.constant 0 : i32
    %c0_i32_0 = arith.constant 0 : i32
    %c0_i32_1 = arith.constant 0 : i32
    return %c0_i32, %arg0, %c0_i32_0 : i32, i32, i32
  }
  func.func @transform_1(%arg0: i32, %arg1: memref<35xf32, #tpu.memory_space<smem>>) -> (i32, i32) {
    %c0_i32 = arith.constant 0 : i32
    %c0_i32_0 = arith.constant 0 : i32
    return %arg0, %c0_i32 : i32, i32
  }
}

</mosaic_0001>

<llo_original>
// kernel: tpu_custom_call.1
$region0: #{tpu_custom_call.1}
  #allocation0 [shape = 'u32[]', space=smem, size = 0x4, offset = 0x4, fixed_abs, tag = 'smem constant byte address 0x4 - core index']
  #allocation1 [shape = 'u32[144,128]{1,0:T(1,128)}', space=vmem, size = 0x12000, scoped, tag = 'internal scratch']
  #allocation2 [shape = 's32[1]{0}', space=sflag, size = 0x4, scoped, tag = 'scoped memory for tpu_custom_call.1']
  #allocation3 [shape = 'u8[512]{0}', space=smem, size = 0x200, scoped, tag = 'prefetched SMEM operand 0']
  %s0 = inlined_call_operand.hbm [shape: f32[35], index: 0, kind: input, shape index: {}]
  %s1 = inlined_call_operand.hbm [shape: f32[3,8,128], index: 1, kind: input, shape index: {}]
  %s2 = inlined_call_operand.hbm [shape: f32[8,128], index: 2, kind: output, shape index: {}]
  %s3 = sld [smem:[#allocation0]]
  $region18: #{tpu_custom_call.1} parent=0
    _
  %s5 = ssub.s32 1, %s3
  %s6 = scalar_select 0, %s5, %s3
  %8 = dma.hbm_to_smem %s0, 16, [#allocation3], [#allocation2]
  %9 = dma.done [#allocation2], 16
  %10 = sfence
  $region1: #{tpu_custom_call.1} parent=0
    #allocation4 [shape = 'u8[12288]{0}', space=vmem, size = 0x3000, scoped, tag = 'input window, operand 1, single buffered']
    #allocation5 [shape = 's32[1]{0}', space=sflag, size = 0x4, scoped, tag = 'scoped memory for tpu_custom_call.1']
    #allocation6 [shape = 's32[1]{0}', space=sflag, size = 0x4, scoped, tag = 'scoped memory for tpu_custom_call.1']
    #allocation7 [shape = 'u8[4096]{0}', space=vmem, size = 0x1000, scoped, tag = 'output window, operand 0, single buffered']
    %11 = vsyncpa [#allocation5], 0
    %12 = vsyncpa [#allocation6], 0
    // Predicated region
    $region2: #{tpu_custom_call.1} parent=1 // pred_check
      _
    $region3: #{tpu_custom_call.1} parent=1 // pred_check_branch
      %14 = sbr.rel (0) target = $region5
    $region4: #{tpu_custom_call.1} parent=1 // pred_region
      %s16 = ssub.s32 384, 384
      %17 = vsyncadd [#allocation5], %s16
      %s18 = sshll.u32 [#allocation4], 4
      %s19 = int_to_ptr.vmem [resolvable:$true] %s18
      %24 = dma.hbm_to_vmem [thread:$0]  %s1, 384, %s19, [#allocation5], 128, 128, 8
    $region5: #{tpu_custom_call.1} parent=1 // pred_fallthru
      _
    // Predicated region
    $region6: #{tpu_custom_call.1} parent=1 // pred_check
      _
    $region7: #{tpu_custom_call.1} parent=1 // pred_check_branch
      %26 = sbr.rel (0) target = $region9
    $region8: #{tpu_custom_call.1} parent=1 // pred_region
      %27 = dma.done [#allocation5], 384
    $region9: #{tpu_custom_call.1} parent=1 // pred_fallthru
      _
    %v28 = vld [vmem:[#allocation4] sm:$0xff]
    %s29 = scalar_lea.vmem [#allocation4], 8
    %v30 = vld [vmem:[%s29] sm:$0xff]
    %s31 = scalar_lea.vmem [#allocation4], 16
    %v32 = vld [vmem:[%s31] sm:$0xff]
    %s33 = sld [smem:[#allocation3]]
    %v34 = vstv %s33
    %v35 = vmul.f32 %v28, %v34
    %s36 = sld [smem:[#allocation3 + $0xc]]
    %v37 = vstv %s36
    %v38 = vadd.f32 %v35, %v37
    %s39 = sld [smem:[#allocation3 + $0x1]]
    %v40 = vstv %s39
    %v41 = vmul.f32 %v30, %v40
    %v42 = vadd.f32 %v38, %v41
    %s43 = sld [smem:[#allocation3 + $0x2]]
    %v44 = vstv %s43
    %v45 = vmul.f32 %v32, %v44
    %v46 = vadd.f32 %v42, %v45
    %v47 = vmax.f32 %v46, 0.0
    %s48 = sld [smem:[#allocation3 + $0x3]]
    %v49 = vstv %s48
    %v50 = vmul.f32 %v28, %v49
    %s51 = sld [smem:[#allocation3 + $0xd]]
    %v52 = vstv %s51
    %v53 = vadd.f32 %v50, %v52
    %s54 = sld [smem:[#allocation3 + $0x4]]
    %v55 = vstv %s54
    %v56 = vmul.f32 %v30, %v55
    %v57 = vadd.f32 %v53, %v56
    %s58 = sld [smem:[#allocation3 + $0x5]]
    %v59 = vstv %s58
    %v60 = vmul.f32 %v32, %v59
    %v61 = vadd.f32 %v57, %v60
    %v62 = vmax.f32 %v61, 0.0
    %s63 = sld [smem:[#allocation3 + $0x6]]
    %v64 = vstv %s63
    %v65 = vmul.f32 %v28, %v64
    %s66 = sld [smem:[#allocation3 + $0xe]]
    %v67 = vstv %s66
    %v68 = vadd.f32 %v65, %v67
    %s69 = sld [smem:[#allocation3 + $0x7]]
    %v70 = vstv %s69
    %v71 = vmul.f32 %v30, %v70
    %v72 = vadd.f32 %v68, %v71
    %s73 = sld [smem:[#allocation3 + $0x8]]
    %v74 = vstv %s73
    %v75 = vmul.f32 %v32, %v74
    %v76 = vadd.f32 %v72, %v75
    %v77 = vmax.f32 %v76, 0.0
    %s78 = sld [smem:[#allocation3 + $0x9]]
    %v79 = vstv %s78
    %v80 = vmul.f32 %v28, %v79
    %s81 = sld [smem:[#allocation3 + $0xf]]
    %v82 = vstv %s81
    %v83 = vadd.f32 %v80, %v82
    %s84 = sld [smem:[#allocation3 + $0xa]]
    %v85 = vstv %s84
    %v86 = vmul.f32 %v30, %v85
    %v87 = vadd.f32 %v83, %v86
    %s88 = sld [smem:[#allocation3 + $0xb]]
    %v89 = vstv %s88
    %v90 = vmul.f32 %v32, %v89
    %v91 = vadd.f32 %v87, %v90
    %v92 = vmax.f32 %v91, 0.0
    %s93 = sld [smem:[#allocation3 + $0x10]]
    %v94 = vstv %s93
    %v95 = vmul.f32 %v47, %v94
    %s96 = sld [smem:[#allocation3 + $0x1c]]
    %v97 = vstv %s96
    %v98 = vadd.f32 %v95, %v97
    %s99 = sld [smem:[#allocation3 + $0x11]]
    %v100 = vstv %s99
    %v101 = vmul.f32 %v62, %v100
    %v102 = vadd.f32 %v98, %v101
    %s103 = sld [smem:[#allocation3 + $0x12]]
    %v104 = vstv %s103
    %v105 = vmul.f32 %v77, %v104
    %v106 = vadd.f32 %v102, %v105
    %s107 = sld [smem:[#allocation3 + $0x13]]
    %v108 = vstv %s107
    %v109 = vmul.f32 %v92, %v108
    %v110 = vadd.f32 %v106, %v109
    %v111 = vmax.f32 %v110, 0.0
    %s112 = sld [smem:[#allocation3 + $0x14]]
    %v113 = vstv %s112
    %v114 = vmul.f32 %v47, %v113
    %s115 = sld [smem:[#allocation3 + $0x1d]]
    %v116 = vstv %s115
    %v117 = vadd.f32 %v114, %v116
    %s118 = sld [smem:[#allocation3 + $0x15]]
    %v119 = vstv %s118
    %v120 = vmul.f32 %v62, %v119
    %v121 = vadd.f32 %v117, %v120
    %s122 = sld [smem:[#allocation3 + $0x16]]
    %v123 = vstv %s122
    %v124 = vmul.f32 %v77, %v123
    %v125 = vadd.f32 %v121, %v124
    %s126 = sld [smem:[#allocation3 + $0x17]]
    %v127 = vstv %s126
    %v128 = vmul.f32 %v92, %v127
    %v129 = vadd.f32 %v125, %v128
    %v130 = vmax.f32 %v129, 0.0
    %s131 = sld [smem:[#allocation3 + $0x18]]
    %v132 = vstv %s131
    %v133 = vmul.f32 %v47, %v132
    %s134 = sld [smem:[#allocation3 + $0x1e]]
    %v135 = vstv %s134
    %v136 = vadd.f32 %v133, %v135
    %s137 = sld [smem:[#allocation3 + $0x19]]
    %v138 = vstv %s137
    %v139 = vmul.f32 %v62, %v138
    %v140 = vadd.f32 %v136, %v139
    %s141 = sld [smem:[#allocation3 + $0x1a]]
    %v142 = vstv %s141
    %v143 = vmul.f32 %v77, %v142
    %v144 = vadd.f32 %v140, %v143
    %s145 = sld [smem:[#allocation3 + $0x1b]]
    %v146 = vstv %s145
    %v147 = vmul.f32 %v92, %v146
    %v148 = vadd.f32 %v144, %v147
    %v149 = vmax.f32 %v148, 0.0
    %s150 = sld [smem:[#allocation3 + $0x1f]]
    %v151 = vstv %s150
    %v152 = vmul.f32 %v111, %v151
    %s153 = sld [smem:[#allocation3 + $0x22]]
    %v154 = vstv %s153
    %v155 = vadd.f32 %v152, %v154
    %s156 = sld [smem:[#allocation3 + $0x20]]
    %v157 = vstv %s156
    %v158 = vmul.f32 %v130, %v157
    %v159 = vadd.f32 %v155, %v158
    %s160 = sld [smem:[#allocation3 + $0x21]]
    %v161 = vstv %s160
    %v162 = vmul.f32 %v149, %v161
    %v163 = vadd.f32 %v159, %v162
    %v164 = vmax.f32 %v163, 0.0
    %165 = vst [vmem:[#allocation7] sm:$0xff] %v164
    // Predicated region
    $region10: #{tpu_custom_call.1} parent=1 // pred_check
      _
    $region11: #{tpu_custom_call.1} parent=1 // pred_check_branch
      %167 = sbr.rel (0) target = $region13
    $region12: #{tpu_custom_call.1} parent=1 // pred_region
      %s169 = ssub.s32 128, 128
      %170 = vsyncadd [#allocation6], %s169
      %s172 = sshll.u32 [#allocation7], 4
      %s173 = int_to_ptr.vmem [resolvable:$true] %s172
      %175 = dma.vmem_to_hbm [thread:$0]  %s173, 128, %s2, [#allocation6]
    $region13: #{tpu_custom_call.1} parent=1 // pred_fallthru
      _
    // Predicated region
    $region14: #{tpu_custom_call.1} parent=1 // pred_check
      _
    $region15: #{tpu_custom_call.1} parent=1 // pred_check_branch
      %177 = sbr.rel (0) target = $region17
    $region16: #{tpu_custom_call.1} parent=1 // pred_region
      %178 = dma.done [#allocation6], 128
    $region17: #{tpu_custom_call.1} parent=1 // pred_fallthru
      _
    %179 = vsyncpa [#allocation5], 1
    %180 = vsyncpa [#allocation6], 1

</llo_original>
